<compile_context>
chip_gen: v7x
topology: tpu7x:2x2x1
jax: 0.10.0
libtpu: 0.0.40
codegen_flags: <defaults>
</compile_context>

<pallas_src>
import functools

import jax
import jax.numpy as jnp
from jax import lax
from jax.experimental import pallas as pl
from jax.experimental.pallas import tpu as pltpu


def _round_up(x, m):
    return (x + m - 1) // m * m


def _make_rnn_kernel(h_pad, time_block, seq_len):
    """Build the recurrent kernel (h_pad / time_block / seq_len are static)."""

    def kernel(xw_ref, h0_ref, wh_ref, out_ref, hfin_ref, h_scr):
        # xw_ref  : (Tb, Bb, n_pad)   precomputed x@Wx + b for this time block (f32)
        # h0_ref  : (Bb, h_pad)       initial hidden (resident, f32)
        # wh_ref  : (h_pad, n_pad)    fused [Wh->h | Wh->out] recurrent weight (bf16)
        # out_ref : (Tb, Bb, out_pad) log-softmax outputs for this block
        # hfin_ref: (Bb, h_pad)       final hidden (resident output block)
        # h_scr   : (Bb, h_pad)       VMEM hidden carry across grid steps (f32)
        ti = pl.program_id(1)

        @pl.when(ti == 0)
        def _():
            h_scr[...] = h0_ref[...]

        t_base = ti * time_block
        wh = wh_ref[...]  # hoisted: loaded once per block, reused across steps

        def step(i, h):
            # Only MXU op on the recurrent critical path: h @ Wh (bf16 in, f32 acc).
            slab = xw_ref[i] + jnp.dot(
                h.astype(wh.dtype), wh, preferred_element_type=jnp.float32)
            h_new = slab[:, :h_pad]        # lane-aligned split (h_pad % 128 == 0)
            logits = slab[:, h_pad:]       # (Bb, out_pad)
            # Padded logit lanes carry a -1e30 bias (baked into xw) -> they lose
            # the max and underflow to exp()==0; no per-step masking needed.
            m = jnp.max(logits, axis=1, keepdims=True)
            shifted = logits - m
            sum_exp = jnp.sum(jnp.exp(shifted), axis=1, keepdims=True)
            out_ref[i] = (shifted - jnp.log(sum_exp)).astype(out_ref.dtype)
            # Freeze the hidden on padded tail steps (when T % Tb != 0).
            return jnp.where(t_base + i < seq_len, h_new, h)

        h = lax.fori_loop(0, time_block, step, h_scr[...], unroll=True)
        h_scr[...] = h
        hfin_ref[...] = h   # resident output -> flushed to HBM once at the end

    return kernel


def pack_params(w_ih, b_ih, w_io, b_io, in_dims, h_dims, out_dims,
                recur_dtype=jnp.bfloat16):
    """One-time pack of the logical weights into the fused, padded layout.

    Logical layout (transposed vs. torch.nn.Linear):
      w_ih: (in_dims + h_dims, h_dims),   b_ih: (h_dims,)
      w_io: (in_dims + h_dims, out_dims), b_io: (out_dims,)
    Packed layout:
      wx: (in_dims, h_pad + out_pad)  rows for `inp`   (consumed outside the kernel)
      wh: (h_pad,   h_pad + out_pad)  rows for `hidden` (resident in VMEM, bf16)
      b : (1,       h_pad + out_pad)  fused bias; padded LOGIT lanes = -1e30
    """
    h_pad = _round_up(h_dims, 128)
    out_pad = _round_up(out_dims, 128)
    n_pad = h_pad + out_pad

    # Rows that multiply `inp` -- used only by the hoisted XLA matmul, so the
    # input dim needs no padding at all.
    wx = jnp.zeros((in_dims, n_pad), jnp.float32)
    wx = wx.at[:, :h_dims].set(w_ih[:in_dims])
    wx = wx.at[:, h_pad:h_pad + out_dims].set(w_io[:in_dims])

    # Rows that multiply `hidden` -- resident in VMEM; bf16 for full-rate MXU.
    wh = jnp.zeros((h_pad, n_pad), jnp.float32)
    wh = wh.at[:h_dims, :h_dims].set(w_ih[in_dims:])
    wh = wh.at[:h_dims, h_pad:h_pad + out_dims].set(w_io[in_dims:])
    wh = wh.astype(recur_dtype)

    # Fused bias (folded into the precomputed input projection).  Padded logit
    # lanes get -1e30 (NOT -inf: keeps (logits - m) finite), so the in-kernel
    # log-softmax needs no iota/where masking.  Padded hidden lanes stay 0 so
    # the padded part of h is exactly 0 through the whole recurrence.
    b = jnp.zeros((1, n_pad), jnp.float32)
    b = b.at[0, :h_dims].set(b_ih)
    b = b.at[0, h_pad:h_pad + out_dims].set(b_io)
    b = b.at[0, h_pad + out_dims:].set(-1e30)
    return wx, wh, b


def rnn_forward_sequence(x_seq, hidden0, packed, dims, *, time_block=8,
                         batch_block=128):
    """Run the RNN over a whole sequence with ONE pallas_call.

    x_seq  : (T, B, in_dims)
    hidden0: (B, h_dims)
    returns (log_probs (T, B, out_dims), h_final (B, h_dims))
    """
    in_dims, h_dims, out_dims = dims
    wx, wh, b = packed
    T, B, _ = x_seq.shape

    h_pad, n_pad = wh.shape
    out_pad = n_pad - h_pad

    tb = max(1, min(time_block, T))
    T_pad = _round_up(T, tb)
    B_pad = _round_up(max(B, 1), 8)
    Bb = max(8, min(batch_block, B_pad))
    B_pad = _round_up(B_pad, Bb)

    # Hoisted input projection: one big (T*B, in) @ (in, n_pad) matmul outside
    # the recurrence, with the fused bias (and -1e30 padded-logit bias) folded
    # in.  Only the narrow raw input is zero-padded (batch/T), not a full
    # in_pad-wide copy of the sequence.
    xp = jnp.zeros((T_pad, B_pad, in_dims), jnp.float32)
    xp = xp.at[:T, :B, :].set(x_seq.astype(jnp.float32))
    xw = (xp.reshape(T_pad * B_pad, in_dims) @ wx).reshape(T_pad, B_pad, n_pad) + b

    h0p = jnp.zeros((B_pad, h_pad), jnp.float32)
    h0p = h0p.at[:B, :h_dims].set(hidden0.astype(jnp.float32))

    kernel = _make_rnn_kernel(h_pad, tb, T)

    grid_spec = pltpu.PrefetchScalarGridSpec(
        num_scalar_prefetch=0,
        grid=(B_pad // Bb, T_pad // tb),
        in_specs=[
            pl.BlockSpec((tb, Bb, n_pad), lambda bb, ti: (ti, bb, 0)),    # xw_t block
            pl.BlockSpec((Bb, h_pad), lambda bb, ti: (bb, 0)),            # h0 (resident)
            pl.BlockSpec((h_pad, n_pad), lambda bb, ti: (0, 0)),          # wh (resident)
        ],
        out_specs=(
            pl.BlockSpec((tb, Bb, out_pad), lambda bb, ti: (ti, bb, 0)),  # log-softmax
            pl.BlockSpec((Bb, h_pad), lambda bb, ti: (bb, 0)),            # final hidden
        ),
        scratch_shapes=[pltpu.VMEM((Bb, h_pad), jnp.float32)],            # hidden carry
    )

    out_p, hfin_p = pl.pallas_call(
        kernel,
        out_shape=(
            jax.ShapeDtypeStruct((T_pad, B_pad, out_pad), jnp.float32),
            jax.ShapeDtypeStruct((B_pad, h_pad), jnp.float32),
        ),
        grid_spec=grid_spec,
        compiler_params=pltpu.CompilerParams(
            # Batch blocks are independent -> "parallel" (v7x megacore shards
            # them); the time axis is a true recurrence -> "arbitrary".
            dimension_semantics=("parallel", "arbitrary"),
            # Fits v7x's 64 MiB VMEM with headroom; harmless on v5e/v6e.
            vmem_limit_bytes=48 * 1024 * 1024,
        ),
    )(xw, h0p, wh)

    return out_p[:T, :B, :out_dims], hfin_p[:B, :h_dims]


def rnn_forward(inp, hidden, packed, dims):
    """Exact equivalent of RNN.forward(inp, hidden) -> (out, h) (single step)."""
    out_seq, h_final = rnn_forward_sequence(inp[None], hidden, packed, dims)
    return out_seq[0], h_final


def init_params(key, in_dims, h_dims, out_dims):
    """Deterministic nn.Linear-style init; logical (transposed) layout."""
    k1, k2, k3, k4 = jax.random.split(key, 4)
    fan_in = in_dims + h_dims
    bound = 1.0 / jnp.sqrt(fan_in)
    w_ih = jax.random.uniform(k1, (fan_in, h_dims), jnp.float32, -bound, bound)
    b_ih = jax.random.uniform(k2, (h_dims,), jnp.float32, -bound, bound)
    w_io = jax.random.uniform(k3, (fan_in, out_dims), jnp.float32, -bound, bound)
    b_io = jax.random.uniform(k4, (out_dims,), jnp.float32, -bound, bound)
    return w_ih, b_ih, w_io, b_io


def reference_sequence(x_seq, hidden0, w_ih, b_ih, w_io, b_io):
    """Plain-JAX step-by-step reference (mirrors the PyTorch module)."""
    h = hidden0
    outs = []
    for t in range(x_seq.shape[0]):
        xcat = jnp.concatenate([x_seq[t], h], axis=1)
        h = xcat @ w_ih + b_ih
        logits = xcat @ w_io + b_io
        outs.append(jax.nn.log_softmax(logits, axis=1))
    return jnp.stack(outs), h


if __name__ == "__main__":
    in_dims, h_dims, out_dims = 16, 32, 8
    batch, seq_len = 2, 8
    dims = (in_dims, h_dims, out_dims)

    key = jax.random.PRNGKey(0)
    kx, kp = jax.random.split(key)

    x_seq = jax.random.normal(kx, (seq_len, batch, in_dims), jnp.float32)
    hidden0 = jnp.zeros((batch, h_dims), jnp.float32)   # RNN.init_hidden semantics

    w_ih, b_ih, w_io, b_io = init_params(kp, in_dims, h_dims, out_dims)
    packed = pack_params(w_ih, b_ih, w_io, b_io, in_dims, h_dims, out_dims)

    # Whole sequence in one pallas_call (time-blocked grid, resident weights).
    seq_fn = jax.jit(functools.partial(rnn_forward_sequence, dims=dims))
    out_seq, h_final = seq_fn(x_seq, hidden0, packed)
    out_seq, h_final = jax.block_until_ready((out_seq, h_final))

    # Single-step forward (same semantics as RNN.forward).
    step_fn = jax.jit(functools.partial(rnn_forward, dims=dims))
    out1, h1 = step_fn(x_seq[0], hidden0, packed)
    out1, h1 = jax.block_until_ready((out1, h1))

    # Reference checks (tolerance loosened for the bf16 recurrent weights).
    out_ref, h_ref_final = reference_sequence(x_seq, hidden0, w_ih, b_ih, w_io, b_io)
    tol = dict(atol=3e-2, rtol=3e-2)
    assert jnp.allclose(out_seq, out_ref, **tol), "sequence log-softmax mismatch"
    assert jnp.allclose(h_final, h_ref_final, **tol), "final hidden mismatch"
    assert jnp.allclose(out1, out_ref[0], **tol), "single-step output mismatch"
    h_ref_step0 = jnp.concatenate([x_seq[0], hidden0], axis=1) @ w_ih + b_ih
    assert jnp.allclose(h1, h_ref_step0, **tol), "single-step hidden mismatch"

    print("KERNEL_OK")
</pallas_src>

<mosaic_0001>
module attributes {stable_mosaic.version = 11 : i64} {
  func.func @kernel(%arg0: i32, %arg1: i32, %arg2: memref<8x8x256xf32, #tpu.memory_space<vmem>>, %arg3: memref<8x128xf32, #tpu.memory_space<vmem>>, %arg4: memref<128x256xbf16, #tpu.memory_space<vmem>>, %arg5: memref<8x8x128xf32, #tpu.memory_space<vmem>>, %arg6: memref<8x128xf32, #tpu.memory_space<vmem>>, %arg7: memref<8x128xf32, #tpu.memory_space<vmem>>) attributes {dimension_semantics = [#tpu.dimension_semantics<parallel>, #tpu.dimension_semantics<arbitrary>], iteration_bounds = array<i64: 1, 1>, scalar_prefetch = 0 : i64, scratch_operands = 1 : i64, tpu.core_type = #tpu.core_type<tc>, window_params = [{transform_indices = @transform_0, window_bounds = array<i64: 8, 8, 256>}, {transform_indices = @transform_1, window_bounds = array<i64: 8, 128>}, {pipeline_mode = #tpu.pipeline_mode<synchronous>, transform_indices = @transform_2, window_bounds = array<i64: 128, 256>}, {transform_indices = @transform_3, window_bounds = array<i64: 8, 8, 128>}, {transform_indices = @transform_4, window_bounds = array<i64: 8, 128>}]} {
    %c0_i32 = arith.constant 0 : i32
    %0 = arith.cmpi eq, %arg1, %c0_i32 : i32
    %1 = arith.extui %0 : i1 to i32
    %c0_i32_0 = arith.constant 0 : i32
    %2 = arith.cmpi ne, %1, %c0_i32_0 : i32
    scf.if %2 {
      %c0_73 = arith.constant 0 : index
      %c0_74 = arith.constant 0 : index
      %208 = vector.load %arg3[%c0_73, %c0_74] : memref<8x128xf32, #tpu.memory_space<vmem>>, vector<8x128xf32>
      %c0_75 = arith.constant 0 : index
      %c0_76 = arith.constant 0 : index
      %209 = vector.load %arg7[%c0_75, %c0_76] : memref<8x128xf32, #tpu.memory_space<vmem>>, vector<8x128xf32>
      tpu.vector_store %arg7[%c0_75, %c0_76], %208 {strides = array<i32>} : memref<8x128xf32, #tpu.memory_space<vmem>>, vector<8x128xf32>,
    } else {
    }
    %c8_i32 = arith.constant 8 : i32
    %3 = arith.muli %arg1, %c8_i32 : i32
    %c0 = arith.constant 0 : index
    %c0_1 = arith.constant 0 : index
    %4 = vector.load %arg4[%c0, %c0_1] : memref<128x256xbf16, #tpu.memory_space<vmem>>, vector<128x256xbf16>
    %c0_2 = arith.constant 0 : index
    %c0_3 = arith.constant 0 : index
    %5 = vector.load %arg7[%c0_2, %c0_3] : memref<8x128xf32, #tpu.memory_space<vmem>>, vector<8x128xf32>
    %c0_i32_4 = arith.constant 0 : i32
    %6 = arith.index_cast %c0_i32_4 : i32 to index
    %c0_5 = arith.constant 0 : index
    %c0_6 = arith.constant 0 : index
    %7 = vector.load %arg2[%6, %c0_5, %c0_6] : memref<8x8x256xf32, #tpu.memory_space<vmem>>, vector<1x8x256xf32>
    %8 = vector.shape_cast %7 : vector<1x8x256xf32> to vector<8x256xf32>
    %9 = arith.truncf %5 : vector<8x128xf32> to vector<8x128xbf16>
    %cst = arith.constant dense<0.000000e+00> : vector<8x256xf32>
    %10 = tpu.matmul %9, %4, %cst {dimension_numbers = #tpu.dot_dimension_numbers<[1], [0], [0], [1], [0, 0, 1, 1], [], []>} : vector<8x128xbf16>, vector<128x256xbf16>, vector<8x256xf32> -> vector<8x256xf32>
    %11 = arith.addf %8, %10 : vector<8x256xf32>
    %12 = vector.extract_strided_slice %11 {offsets = [0, 0], sizes = [8, 128], strides = [1, 1]} : vector<8x256xf32> to vector<8x128xf32>
    %13 = vector.extract_strided_slice %11 {offsets = [0, 128], sizes = [8, 128], strides = [1, 1]} : vector<8x256xf32> to vector<8x128xf32>
    %cst_7 = arith.constant dense<0xFF800000> : vector<8xf32>
    %14 = vector.multi_reduction <maximumf>, %13, %cst_7 [1] : vector<8x128xf32> to vector<8xf32>
    %15 = vector.shape_cast %14 : vector<8xf32> to vector<8x1xf32>
    %16 = vector.broadcast %15 : vector<8x1xf32> to vector<8x128xf32>
    %17 = arith.subf %13, %16 : vector<8x128xf32>
    %18 = math.exp %17 : vector<8x128xf32>
    %cst_8 = arith.constant dense<0.000000e+00> : vector<8xf32>
    %19 = vector.multi_reduction <add>, %18, %cst_8 [1] : vector<8x128xf32> to vector<8xf32>
    %20 = vector.shape_cast %19 : vector<8xf32> to vector<8x1xf32>
    %21 = math.log %20 : vector<8x1xf32>
    %22 = vector.broadcast %21 : vector<8x1xf32> to vector<8x128xf32>
    %23 = arith.subf %17, %22 : vector<8x128xf32>
    %24 = arith.index_cast %c0_i32_4 : i32 to index
    %c0_9 = arith.constant 0 : index
    %c0_10 = arith.constant 0 : index
    %25 = vector.load %arg5[%24, %c0_9, %c0_10] : memref<8x8x128xf32, #tpu.memory_space<vmem>>, vector<1x8x128xf32>
    %26 = vector.shape_cast %25 : vector<1x8x128xf32> to vector<8x128xf32>
    %27 = vector.shape_cast %23 : vector<8x128xf32> to vector<1x8x128xf32>
    tpu.vector_store %arg5[%24, %c0_9, %c0_10], %27 {strides = array<i32>} : memref<8x8x128xf32, #tpu.memory_space<vmem>>, vector<1x8x128xf32>,
    %28 = arith.addi %3, %c0_i32_4 : i32
    %c8_i32_11 = arith.constant 8 : i32
    %29 = arith.cmpi slt, %28, %c8_i32_11 : i32
    %30 = arith.select %29, %12, %5 : vector<8x128xf32>
    %c1_i32 = arith.constant 1 : i32
    %31 = arith.index_cast %c1_i32 : i32 to index
    %c0_12 = arith.constant 0 : index
    %c0_13 = arith.constant 0 : index
    %32 = vector.load %arg2[%31, %c0_12, %c0_13] : memref<8x8x256xf32, #tpu.memory_space<vmem>>, vector<1x8x256xf32>
    %33 = vector.shape_cast %32 : vector<1x8x256xf32> to vector<8x256xf32>
    %34 = arith.truncf %30 : vector<8x128xf32> to vector<8x128xbf16>
    %cst_14 = arith.constant dense<0.000000e+00> : vector<8x256xf32>
    %35 = tpu.matmul %34, %4, %cst_14 {dimension_numbers = #tpu.dot_dimension_numbers<[1], [0], [0], [1], [0, 0, 1, 1], [], []>} : vector<8x128xbf16>, vector<128x256xbf16>, vector<8x256xf32> -> vector<8x256xf32>
    %36 = arith.addf %33, %35 : vector<8x256xf32>
    %37 = vector.extract_strided_slice %36 {offsets = [0, 0], sizes = [8, 128], strides = [1, 1]} : vector<8x256xf32> to vector<8x128xf32>
    %38 = vector.extract_strided_slice %36 {offsets = [0, 128], sizes = [8, 128], strides = [1, 1]} : vector<8x256xf32> to vector<8x128xf32>
    %cst_15 = arith.constant dense<0xFF800000> : vector<8xf32>
    %39 = vector.multi_reduction <maximumf>, %38, %cst_15 [1] : vector<8x128xf32> to vector<8xf32>
    %40 = vector.shape_cast %39 : vector<8xf32> to vector<8x1xf32>
    %41 = vector.broadcast %40 : vector<8x1xf32> to vector<8x128xf32>
    %42 = arith.subf %38, %41 : vector<8x128xf32>
    %43 = math.exp %42 : vector<8x128xf32>
    %cst_16 = arith.constant dense<0.000000e+00> : vector<8xf32>
    %44 = vector.multi_reduction <add>, %43, %cst_16 [1] : vector<8x128xf32> to vector<8xf32>
    %45 = vector.shape_cast %44 : vector<8xf32> to vector<8x1xf32>
    %46 = math.log %45 : vector<8x1xf32>
    %47 = vector.broadcast %46 : vector<8x1xf32> to vector<8x128xf32>
    %48 = arith.subf %42, %47 : vector<8x128xf32>
    %49 = arith.index_cast %c1_i32 : i32 to index
    %c0_17 = arith.constant 0 : index
    %c0_18 = arith.constant 0 : index
    %50 = vector.load %arg5[%49, %c0_17, %c0_18] : memref<8x8x128xf32, #tpu.memory_space<vmem>>, vector<1x8x128xf32>
    %51 = vector.shape_cast %50 : vector<1x8x128xf32> to vector<8x128xf32>
    %52 = vector.shape_cast %48 : vector<8x128xf32> to vector<1x8x128xf32>
    tpu.vector_store %arg5[%49, %c0_17, %c0_18], %52 {strides = array<i32>} : memref<8x8x128xf32, #tpu.memory_space<vmem>>, vector<1x8x128xf32>,
    %53 = arith.addi %3, %c1_i32 : i32
    %c8_i32_19 = arith.constant 8 : i32
    %54 = arith.cmpi slt, %53, %c8_i32_19 : i32
    %55 = arith.select %54, %37, %30 : vector<8x128xf32>
    %c2_i32 = arith.constant 2 : i32
    %56 = arith.index_cast %c2_i32 : i32 to index
    %c0_20 = arith.constant 0 : index
    %c0_21 = arith.constant 0 : index
    %57 = vector.load %arg2[%56, %c0_20, %c0_21] : memref<8x8x256xf32, #tpu.memory_space<vmem>>, vector<1x8x256xf32>
    %58 = vector.shape_cast %57 : vector<1x8x256xf32> to vector<8x256xf32>
    %59 = arith.truncf %55 : vector<8x128xf32> to vector<8x128xbf16>
    %cst_22 = arith.constant dense<0.000000e+00> : vector<8x256xf32>
    %60 = tpu.matmul %59, %4, %cst_22 {dimension_numbers = #tpu.dot_dimension_numbers<[1], [0], [0], [1], [0, 0, 1, 1], [], []>} : vector<8x128xbf16>, vector<128x256xbf16>, vector<8x256xf32> -> vector<8x256xf32>
    %61 = arith.addf %58, %60 : vector<8x256xf32>
    %62 = vector.extract_strided_slice %61 {offsets = [0, 0], sizes = [8, 128], strides = [1, 1]} : vector<8x256xf32> to vector<8x128xf32>
    %63 = vector.extract_strided_slice %61 {offsets = [0, 128], sizes = [8, 128], strides = [1, 1]} : vector<8x256xf32> to vector<8x128xf32>
    %cst_23 = arith.constant dense<0xFF800000> : vector<8xf32>
    %64 = vector.multi_reduction <maximumf>, %63, %cst_23 [1] : vector<8x128xf32> to vector<8xf32>
    %65 = vector.shape_cast %64 : vector<8xf32> to vector<8x1xf32>
    %66 = vector.broadcast %65 : vector<8x1xf32> to vector<8x128xf32>
    %67 = arith.subf %63, %66 : vector<8x128xf32>
    %68 = math.exp %67 : vector<8x128xf32>
    %cst_24 = arith.constant dense<0.000000e+00> : vector<8xf32>
    %69 = vector.multi_reduction <add>, %68, %cst_24 [1] : vector<8x128xf32> to vector<8xf32>
    %70 = vector.shape_cast %69 : vector<8xf32> to vector<8x1xf32>
    %71 = math.log %70 : vector<8x1xf32>
    %72 = vector.broadcast %71 : vector<8x1xf32> to vector<8x128xf32>
    %73 = arith.subf %67, %72 : vector<8x128xf32>
    %74 = arith.index_cast %c2_i32 : i32 to index
    %c0_25 = arith.constant 0 : index
    %c0_26 = arith.constant 0 : index
    %75 = vector.load %arg5[%74, %c0_25, %c0_26] : memref<8x8x128xf32, #tpu.memory_space<vmem>>, vector<1x8x128xf32>
    %76 = vector.shape_cast %75 : vector<1x8x128xf32> to vector<8x128xf32>
    %77 = vector.shape_cast %73 : vector<8x128xf32> to vector<1x8x128xf32>
    tpu.vector_store %arg5[%74, %c0_25, %c0_26], %77 {strides = array<i32>} : memref<8x8x128xf32, #tpu.memory_space<vmem>>, vector<1x8x128xf32>,
    %78 = arith.addi %3, %c2_i32 : i32
    %c8_i32_27 = arith.constant 8 : i32
    %79 = arith.cmpi slt, %78, %c8_i32_27 : i32
    %80 = arith.select %79, %62, %55 : vector<8x128xf32>
    %c3_i32 = arith.constant 3 : i32
    %81 = arith.index_cast %c3_i32 : i32 to index
    %c0_28 = arith.constant 0 : index
    %c0_29 = arith.constant 0 : index
    %82 = vector.load %arg2[%81, %c0_28, %c0_29] : memref<8x8x256xf32, #tpu.memory_space<vmem>>, vector<1x8x256xf32>
    %83 = vector.shape_cast %82 : vector<1x8x256xf32> to vector<8x256xf32>
    %84 = arith.truncf %80 : vector<8x128xf32> to vector<8x128xbf16>
    %cst_30 = arith.constant dense<0.000000e+00> : vector<8x256xf32>
    %85 = tpu.matmul %84, %4, %cst_30 {dimension_numbers = #tpu.dot_dimension_numbers<[1], [0], [0], [1], [0, 0, 1, 1], [], []>} : vector<8x128xbf16>, vector<128x256xbf16>, vector<8x256xf32> -> vector<8x256xf32>
    %86 = arith.addf %83, %85 : vector<8x256xf32>
    %87 = vector.extract_strided_slice %86 {offsets = [0, 0], sizes = [8, 128], strides = [1, 1]} : vector<8x256xf32> to vector<8x128xf32>
    %88 = vector.extract_strided_slice %86 {offsets = [0, 128], sizes = [8, 128], strides = [1, 1]} : vector<8x256xf32> to vector<8x128xf32>
    %cst_31 = arith.constant dense<0xFF800000> : vector<8xf32>
    %89 = vector.multi_reduction <maximumf>, %88, %cst_31 [1] : vector<8x128xf32> to vector<8xf32>
    %90 = vector.shape_cast %89 : vector<8xf32> to vector<8x1xf32>
    %91 = vector.broadcast %90 : vector<8x1xf32> to vector<8x128xf32>
    %92 = arith.subf %88, %91 : vector<8x128xf32>
    %93 = math.exp %92 : vector<8x128xf32>
    %cst_32 = arith.constant dense<0.000000e+00> : vector<8xf32>
    %94 = vector.multi_reduction <add>, %93, %cst_32 [1] : vector<8x128xf32> to vector<8xf32>
    %95 = vector.shape_cast %94 : vector<8xf32> to vector<8x1xf32>
    %96 = math.log %95 : vector<8x1xf32>
    %97 = vector.broadcast %96 : vector<8x1xf32> to vector<8x128xf32>
    %98 = arith.subf %92, %97 : vector<8x128xf32>
    %99 = arith.index_cast %c3_i32 : i32 to index
    %c0_33 = arith.constant 0 : index
    %c0_34 = arith.constant 0 : index
    %100 = vector.load %arg5[%99, %c0_33, %c0_34] : memref<8x8x128xf32, #tpu.memory_space<vmem>>, vector<1x8x128xf32>
    %101 = vector.shape_cast %100 : vector<1x8x128xf32> to vector<8x128xf32>
    %102 = vector.shape_cast %98 : vector<8x128xf32> to vector<1x8x128xf32>
    tpu.vector_store %arg5[%99, %c0_33, %c0_34], %102 {strides = array<i32>} : memref<8x8x128xf32, #tpu.memory_space<vmem>>, vector<1x8x128xf32>,
    %103 = arith.addi %3, %c3_i32 : i32
    %c8_i32_35 = arith.constant 8 : i32
    %104 = arith.cmpi slt, %103, %c8_i32_35 : i32
    %105 = arith.select %104, %87, %80 : vector<8x128xf32>
    %c4_i32 = arith.constant 4 : i32
    %106 = arith.index_cast %c4_i32 : i32 to index
    %c0_36 = arith.constant 0 : index
    %c0_37 = arith.constant 0 : index
    %107 = vector.load %arg2[%106, %c0_36, %c0_37] : memref<8x8x256xf32, #tpu.memory_space<vmem>>, vector<1x8x256xf32>
    %108 = vector.shape_cast %107 : vector<1x8x256xf32> to vector<8x256xf32>
    %109 = arith.truncf %105 : vector<8x128xf32> to vector<8x128xbf16>
    %cst_38 = arith.constant dense<0.000000e+00> : vector<8x256xf32>
    %110 = tpu.matmul %109, %4, %cst_38 {dimension_numbers = #tpu.dot_dimension_numbers<[1], [0], [0], [1], [0, 0, 1, 1], [], []>} : vector<8x128xbf16>, vector<128x256xbf16>, vector<8x256xf32> -> vector<8x256xf32>
    %111 = arith.addf %108, %110 : vector<8x256xf32>
    %112 = vector.extract_strided_slice %111 {offsets = [0, 0], sizes = [8, 128], strides = [1, 1]} : vector<8x256xf32> to vector<8x128xf32>
    %113 = vector.extract_strided_slice %111 {offsets = [0, 128], sizes = [8, 128], strides = [1, 1]} : vector<8x256xf32> to vector<8x128xf32>
    %cst_39 = arith.constant dense<0xFF800000> : vector<8xf32>
    %114 = vector.multi_reduction <maximumf>, %113, %cst_39 [1] : vector<8x128xf32> to vector<8xf32>
    %115 = vector.shape_cast %114 : vector<8xf32> to vector<8x1xf32>
    %116 = vector.broadcast %115 : vector<8x1xf32> to vector<8x128xf32>
    %117 = arith.subf %113, %116 : vector<8x128xf32>
    %118 = math.exp %117 : vector<8x128xf32>
    %cst_40 = arith.constant dense<0.000000e+00> : vector<8xf32>
    %119 = vector.multi_reduction <add>, %118, %cst_40 [1] : vector<8x128xf32> to vector<8xf32>
    %120 = vector.shape_cast %119 : vector<8xf32> to vector<8x1xf32>
    %121 = math.log %120 : vector<8x1xf32>
    %122 = vector.broadcast %121 : vector<8x1xf32> to vector<8x128xf32>
    %123 = arith.subf %117, %122 : vector<8x128xf32>
    %124 = arith.index_cast %c4_i32 : i32 to index
    %c0_41 = arith.constant 0 : index
    %c0_42 = arith.constant 0 : index
    %125 = vector.load %arg5[%124, %c0_41, %c0_42] : memref<8x8x128xf32, #tpu.memory_space<vmem>>, vector<1x8x128xf32>
    %126 = vector.shape_cast %125 : vector<1x8x128xf32> to vector<8x128xf32>
    %127 = vector.shape_cast %123 : vector<8x128xf32> to vector<1x8x128xf32>
    tpu.vector_store %arg5[%124, %c0_41, %c0_42], %127 {strides = array<i32>} : memref<8x8x128xf32, #tpu.memory_space<vmem>>, vector<1x8x128xf32>,
    %128 = arith.addi %3, %c4_i32 : i32
    %c8_i32_43 = arith.constant 8 : i32
    %129 = arith.cmpi slt, %128, %c8_i32_43 : i32
    %130 = arith.select %129, %112, %105 : vector<8x128xf32>
    %c5_i32 = arith.constant 5 : i32
    %131 = arith.index_cast %c5_i32 : i32 to index
    %c0_44 = arith.constant 0 : index
    %c0_45 = arith.constant 0 : index
    %132 = vector.load %arg2[%131, %c0_44, %c0_45] : memref<8x8x256xf32, #tpu.memory_space<vmem>>, vector<1x8x256xf32>
    %133 = vector.shape_cast %132 : vector<1x8x256xf32> to vector<8x256xf32>
    %134 = arith.truncf %130 : vector<8x128xf32> to vector<8x128xbf16>
    %cst_46 = arith.constant dense<0.000000e+00> : vector<8x256xf32>
    %135 = tpu.matmul %134, %4, %cst_46 {dimension_numbers = #tpu.dot_dimension_numbers<[1], [0], [0], [1], [0, 0, 1, 1], [], []>} : vector<8x128xbf16>, vector<128x256xbf16>, vector<8x256xf32> -> vector<8x256xf32>
    %136 = arith.addf %133, %135 : vector<8x256xf32>
    %137 = vector.extract_strided_slice %136 {offsets = [0, 0], sizes = [8, 128], strides = [1, 1]} : vector<8x256xf32> to vector<8x128xf32>
    %138 = vector.extract_strided_slice %136 {offsets = [0, 128], sizes = [8, 128], strides = [1, 1]} : vector<8x256xf32> to vector<8x128xf32>
    %cst_47 = arith.constant dense<0xFF800000> : vector<8xf32>
    %139 = vector.multi_reduction <maximumf>, %138, %cst_47 [1] : vector<8x128xf32> to vector<8xf32>
    %140 = vector.shape_cast %139 : vector<8xf32> to vector<8x1xf32>
    %141 = vector.broadcast %140 : vector<8x1xf32> to vector<8x128xf32>
    %142 = arith.subf %138, %141 : vector<8x128xf32>
    %143 = math.exp %142 : vector<8x128xf32>
    %cst_48 = arith.constant dense<0.000000e+00> : vector<8xf32>
    %144 = vector.multi_reduction <add>, %143, %cst_48 [1] : vector<8x128xf32> to vector<8xf32>
    %145 = vector.shape_cast %144 : vector<8xf32> to vector<8x1xf32>
    %146 = math.log %145 : vector<8x1xf32>
    %147 = vector.broadcast %146 : vector<8x1xf32> to vector<8x128xf32>
    %148 = arith.subf %142, %147 : vector<8x128xf32>
    %149 = arith.index_cast %c5_i32 : i32 to index
    %c0_49 = arith.constant 0 : index
    %c0_50 = arith.constant 0 : index
    %150 = vector.load %arg5[%149, %c0_49, %c0_50] : memref<8x8x128xf32, #tpu.memory_space<vmem>>, vector<1x8x128xf32>
    %151 = vector.shape_cast %150 : vector<1x8x128xf32> to vector<8x128xf32>
    %152 = vector.shape_cast %148 : vector<8x128xf32> to vector<1x8x128xf32>
    tpu.vector_store %arg5[%149, %c0_49, %c0_50], %152 {strides = array<i32>} : memref<8x8x128xf32, #tpu.memory_space<vmem>>, vector<1x8x128xf32>,
    %153 = arith.addi %3, %c5_i32 : i32
    %c8_i32_51 = arith.constant 8 : i32
    %154 = arith.cmpi slt, %153, %c8_i32_51 : i32
    %155 = arith.select %154, %137, %130 : vector<8x128xf32>
    %c6_i32 = arith.constant 6 : i32
    %156 = arith.index_cast %c6_i32 : i32 to index
    %c0_52 = arith.constant 0 : index
    %c0_53 = arith.constant 0 : index
    %157 = vector.load %arg2[%156, %c0_52, %c0_53] : memref<8x8x256xf32, #tpu.memory_space<vmem>>, vector<1x8x256xf32>
    %158 = vector.shape_cast %157 : vector<1x8x256xf32> to vector<8x256xf32>
    %159 = arith.truncf %155 : vector<8x128xf32> to vector<8x128xbf16>
    %cst_54 = arith.constant dense<0.000000e+00> : vector<8x256xf32>
    %160 = tpu.matmul %159, %4, %cst_54 {dimension_numbers = #tpu.dot_dimension_numbers<[1], [0], [0], [1], [0, 0, 1, 1], [], []>} : vector<8x128xbf16>, vector<128x256xbf16>, vector<8x256xf32> -> vector<8x256xf32>
    %161 = arith.addf %158, %160 : vector<8x256xf32>
    %162 = vector.extract_strided_slice %161 {offsets = [0, 0], sizes = [8, 128], strides = [1, 1]} : vector<8x256xf32> to vector<8x128xf32>
    %163 = vector.extract_strided_slice %161 {offsets = [0, 128], sizes = [8, 128], strides = [1, 1]} : vector<8x256xf32> to vector<8x128xf32>
    %cst_55 = arith.constant dense<0xFF800000> : vector<8xf32>
    %164 = vector.multi_reduction <maximumf>, %163, %cst_55 [1] : vector<8x128xf32> to vector<8xf32>
    %165 = vector.shape_cast %164 : vector<8xf32> to vector<8x1xf32>
    %166 = vector.broadcast %165 : vector<8x1xf32> to vector<8x128xf32>
    %167 = arith.subf %163, %166 : vector<8x128xf32>
    %168 = math.exp %167 : vector<8x128xf32>
    %cst_56 = arith.constant dense<0.000000e+00> : vector<8xf32>
    %169 = vector.multi_reduction <add>, %168, %cst_56 [1] : vector<8x128xf32> to vector<8xf32>
    %170 = vector.shape_cast %169 : vector<8xf32> to vector<8x1xf32>
    %171 = math.log %170 : vector<8x1xf32>
    %172 = vector.broadcast %171 : vector<8x1xf32> to vector<8x128xf32>
    %173 = arith.subf %167, %172 : vector<8x128xf32>
    %174 = arith.index_cast %c6_i32 : i32 to index
    %c0_57 = arith.constant 0 : index
    %c0_58 = arith.constant 0 : index
    %175 = vector.load %arg5[%174, %c0_57, %c0_58] : memref<8x8x128xf32, #tpu.memory_space<vmem>>, vector<1x8x128xf32>
    %176 = vector.shape_cast %175 : vector<1x8x128xf32> to vector<8x128xf32>
    %177 = vector.shape_cast %173 : vector<8x128xf32> to vector<1x8x128xf32>
    tpu.vector_store %arg5[%174, %c0_57, %c0_58], %177 {strides = array<i32>} : memref<8x8x128xf32, #tpu.memory_space<vmem>>, vector<1x8x128xf32>,
    %178 = arith.addi %3, %c6_i32 : i32
    %c8_i32_59 = arith.constant 8 : i32
    %179 = arith.cmpi slt, %178, %c8_i32_59 : i32
    %180 = arith.select %179, %162, %155 : vector<8x128xf32>
    %c7_i32 = arith.constant 7 : i32
    %181 = arith.index_cast %c7_i32 : i32 to index
    %c0_60 = arith.constant 0 : index
    %c0_61 = arith.constant 0 : index
    %182 = vector.load %arg2[%181, %c0_60, %c0_61] : memref<8x8x256xf32, #tpu.memory_space<vmem>>, vector<1x8x256xf32>
    %183 = vector.shape_cast %182 : vector<1x8x256xf32> to vector<8x256xf32>
    %184 = arith.truncf %180 : vector<8x128xf32> to vector<8x128xbf16>
    %cst_62 = arith.constant dense<0.000000e+00> : vector<8x256xf32>
    %185 = tpu.matmul %184, %4, %cst_62 {dimension_numbers = #tpu.dot_dimension_numbers<[1], [0], [0], [1], [0, 0, 1, 1], [], []>} : vector<8x128xbf16>, vector<128x256xbf16>, vector<8x256xf32> -> vector<8x256xf32>
    %186 = arith.addf %183, %185 : vector<8x256xf32>
    %187 = vector.extract_strided_slice %186 {offsets = [0, 0], sizes = [8, 128], strides = [1, 1]} : vector<8x256xf32> to vector<8x128xf32>
    %188 = vector.extract_strided_slice %186 {offsets = [0, 128], sizes = [8, 128], strides = [1, 1]} : vector<8x256xf32> to vector<8x128xf32>
    %cst_63 = arith.constant dense<0xFF800000> : vector<8xf32>
    %189 = vector.multi_reduction <maximumf>, %188, %cst_63 [1] : vector<8x128xf32> to vector<8xf32>
    %190 = vector.shape_cast %189 : vector<8xf32> to vector<8x1xf32>
    %191 = vector.broadcast %190 : vector<8x1xf32> to vector<8x128xf32>
    %192 = arith.subf %188, %191 : vector<8x128xf32>
    %193 = math.exp %192 : vector<8x128xf32>
    %cst_64 = arith.constant dense<0.000000e+00> : vector<8xf32>
    %194 = vector.multi_reduction <add>, %193, %cst_64 [1] : vector<8x128xf32> to vector<8xf32>
    %195 = vector.shape_cast %194 : vector<8xf32> to vector<8x1xf32>
    %196 = math.log %195 : vector<8x1xf32>
    %197 = vector.broadcast %196 : vector<8x1xf32> to vector<8x128xf32>
    %198 = arith.subf %192, %197 : vector<8x128xf32>
    %199 = arith.index_cast %c7_i32 : i32 to index
    %c0_65 = arith.constant 0 : index
    %c0_66 = arith.constant 0 : index
    %200 = vector.load %arg5[%199, %c0_65, %c0_66] : memref<8x8x128xf32, #tpu.memory_space<vmem>>, vector<1x8x128xf32>
    %201 = vector.shape_cast %200 : vector<1x8x128xf32> to vector<8x128xf32>
    %202 = vector.shape_cast %198 : vector<8x128xf32> to vector<1x8x128xf32>
    tpu.vector_store %arg5[%199, %c0_65, %c0_66], %202 {strides = array<i32>} : memref<8x8x128xf32, #tpu.memory_space<vmem>>, vector<1x8x128xf32>,
    %203 = arith.addi %3, %c7_i32 : i32
    %c8_i32_67 = arith.constant 8 : i32
    %204 = arith.cmpi slt, %203, %c8_i32_67 : i32
    %205 = arith.select %204, %187, %180 : vector<8x128xf32>
    %c8_i32_68 = arith.constant 8 : i32
    %c0_69 = arith.constant 0 : index
    %c0_70 = arith.constant 0 : index
    %206 = vector.load %arg7[%c0_69, %c0_70] : memref<8x128xf32, #tpu.memory_space<vmem>>, vector<8x128xf32>
    tpu.vector_store %arg7[%c0_69, %c0_70], %205 {strides = array<i32>} : memref<8x128xf32, #tpu.memory_space<vmem>>, vector<8x128xf32>,
    %c0_71 = arith.constant 0 : index
    %c0_72 = arith.constant 0 : index
    %207 = vector.load %arg6[%c0_71, %c0_72] : memref<8x128xf32, #tpu.memory_space<vmem>>, vector<8x128xf32>
    tpu.vector_store %arg6[%c0_71, %c0_72], %205 {strides = array<i32>} : memref<8x128xf32, #tpu.memory_space<vmem>>, vector<8x128xf32>,
    return
  }
  func.func @transform_0(%arg0: i32, %arg1: i32) -> (i32, i32, i32) {
    %c0_i32 = arith.constant 0 : i32
    %c0_i32_0 = arith.constant 0 : i32
    return %arg1, %arg0, %c0_i32 : i32, i32, i32
  }
  func.func @transform_1(%arg0: i32, %arg1: i32) -> (i32, i32) {
    %c0_i32 = arith.constant 0 : i32
    %c0_i32_0 = arith.constant 0 : i32
    return %arg0, %c0_i32 : i32, i32
  }
  func.func @transform_2(%arg0: i32, %arg1: i32) -> (i32, i32) {
    %c0_i32 = arith.constant 0 : i32
    %c0_i32_0 = arith.constant 0 : i32
    %c0_i32_1 = arith.constant 0 : i32
    return %c0_i32, %c0_i32_0 : i32, i32
  }
  func.func @transform_3(%arg0: i32, %arg1: i32) -> (i32, i32, i32) {
    %c0_i32 = arith.constant 0 : i32
    %c0_i32_0 = arith.constant 0 : i32
    return %arg1, %arg0, %c0_i32 : i32, i32, i32
  }
  func.func @transform_4(%arg0: i32, %arg1: i32) -> (i32, i32) {
    %c0_i32 = arith.constant 0 : i32
    %c0_i32_0 = arith.constant 0 : i32
    return %arg0, %c0_i32 : i32, i32
  }
}

</mosaic_0001>

<llo_original>
// kernel: rnn_forward_sequence.1
$region0: #{rnn_forward_sequence.1}
  #allocation0 [shape = 'u32[]', space=smem, size = 0x4, offset = 0x4, fixed_abs, tag = 'smem constant byte address 0x4 - core index']
  #allocation1 [shape = 'u32[144,128]{1,0:T(1,128)}', space=vmem, size = 0x12000, scoped, tag = 'internal scratch']
  #allocation2 [shape = 'f32[8,128]{1,0:T(8,128)}', space=vmem, size = 0x1000, scoped, tag = 'scratch operand']
  %s0 = inlined_call_operand.vmem [shape: f32[8,8,256], index: 0, kind: input, shape index: {}]
  %s1 = inlined_call_operand.vmem [shape: f32[8,128], index: 1, kind: input, shape index: {}]
  %s2 = inlined_call_operand.vmem [shape: bf16[128,256], index: 2, kind: input, shape index: {}]
  %s3 = inlined_call_operand.vmem [shape: f32[8,8,128], index: 3, kind: output, shape index: {0}]
  %s4 = inlined_call_operand.vmem [shape: f32[8,128], index: 4, kind: output, shape index: {1}]
  %5 = xla_tuple %s3, %s4
  %s6 = sld [smem:[#allocation0]]
  $region34: #{rnn_forward_sequence.1} parent=0
    _
  %s8 = ssub.s32 1, %s6
  %s9 = scalar_select 0, %s8, %s6
  // Predicated region
  $region2: #{rnn_forward_sequence.1} parent=0 // pred_check
    _
  $region3: #{rnn_forward_sequence.1} parent=0 // pred_check_branch
    %11 = sbr.rel (0) target = $region5
  $region4: #{rnn_forward_sequence.1} parent=0 // pred_region
    _
  $region5: #{rnn_forward_sequence.1} parent=0 // pred_fallthru
    _
  // Predicated region
  $region6: #{rnn_forward_sequence.1} parent=0 // pred_check
    _
  $region7: #{rnn_forward_sequence.1} parent=0 // pred_check_branch
    %13 = sbr.rel (0) target = $region9
  $region8: #{rnn_forward_sequence.1} parent=0 // pred_region
    _
  $region9: #{rnn_forward_sequence.1} parent=0 // pred_fallthru
    _
  // Predicated region
  $region10: #{rnn_forward_sequence.1} parent=0 // pred_check
    _
  $region11: #{rnn_forward_sequence.1} parent=0 // pred_check_branch
    %15 = sbr.rel (0) target = $region13
  $region12: #{rnn_forward_sequence.1} parent=0 // pred_region
    _
  $region13: #{rnn_forward_sequence.1} parent=0 // pred_fallthru
    _
  %p17 = scmp.eq.s32.totalorder 0, 0
  // Predicated region
  $region14: #{rnn_forward_sequence.1} parent=0 // pred_check
    %p18 = pneg %p17
  $region15: #{rnn_forward_sequence.1} parent=0 // pred_check_branch
    %20 = sbr.rel (%p18) target = $region17
  $region16: #{rnn_forward_sequence.1} parent=0 // pred_region
    %v21 = vld [vmem:[%s1] sm:$0xff]
    %22 = vst [vmem:[#allocation2] sm:$0xff] %v21
  $region17: #{rnn_forward_sequence.1} parent=0 // pred_fallthru
    _
  %s23 = smul.u32 0, 8
  %v24 = vld [vmem:[%s2] sm:$0xff]
  %v25 = vld [vmem:[%s2 + $0x8] sm:$0xff]
  %v26 = vld [vmem:[%s2 + $0x10] sm:$0xff]
  %v27 = vld [vmem:[%s2 + $0x18] sm:$0xff]
  %v28 = vld [vmem:[%s2 + $0x20] sm:$0xff]
  %v29 = vld [vmem:[%s2 + $0x28] sm:$0xff]
  %v30 = vld [vmem:[%s2 + $0x30] sm:$0xff]
  %v31 = vld [vmem:[%s2 + $0x38] sm:$0xff]
  %v32 = vld [vmem:[%s2 + $0x40] sm:$0xff]
  %v33 = vld [vmem:[%s2 + $0x48] sm:$0xff]
  %v34 = vld [vmem:[%s2 + $0x50] sm:$0xff]
  %v35 = vld [vmem:[%s2 + $0x58] sm:$0xff]
  %v36 = vld [vmem:[%s2 + $0x60] sm:$0xff]
  %v37 = vld [vmem:[%s2 + $0x68] sm:$0xff]
  %v38 = vld [vmem:[%s2 + $0x70] sm:$0xff]
  %v39 = vld [vmem:[%s2 + $0x78] sm:$0xff]
  %v40 = vld [vmem:[#allocation2] sm:$0xff]
  %v41 = vld [vmem:[%s0] sm:$0xff]
  %v42 = vld [vmem:[%s0 + $0x8] sm:$0xff]
  %v43 = vpack.c.bf16 %v40, %v40
  %v60 = vunpack.c.l.b16 %v24
  %v61 = vunpack.c.h.b16 %v24
  %v62 = vunpack.c.l.b16 %v25
  %v63 = vunpack.c.h.b16 %v25
  %v64 = vunpack.c.l.b16 %v26
  %v65 = vunpack.c.h.b16 %v26
  %v66 = vunpack.c.l.b16 %v27
  %v67 = vunpack.c.h.b16 %v27
  %v68 = vunpack.c.l.b16 %v28
  %v69 = vunpack.c.h.b16 %v28
  %v70 = vunpack.c.l.b16 %v29
  %v71 = vunpack.c.h.b16 %v29
  %v72 = vunpack.c.l.b16 %v30
  %v73 = vunpack.c.h.b16 %v30
  %v74 = vunpack.c.l.b16 %v31
  %v75 = vunpack.c.h.b16 %v31
  %v76 = vunpack.c.l.b16 %v32
  %v77 = vunpack.c.h.b16 %v32
  %v78 = vunpack.c.l.b16 %v33
  %v79 = vunpack.c.h.b16 %v33
  %v80 = vunpack.c.l.b16 %v34
  %v81 = vunpack.c.h.b16 %v34
  %v82 = vunpack.c.l.b16 %v35
  %v83 = vunpack.c.h.b16 %v35
  %v84 = vunpack.c.l.b16 %v36
  %v85 = vunpack.c.h.b16 %v36
  %v86 = vunpack.c.l.b16 %v37
  %v87 = vunpack.c.h.b16 %v37
  %v88 = vunpack.c.l.b16 %v38
  %v89 = vunpack.c.h.b16 %v38
  %v90 = vunpack.c.l.b16 %v39
  %v91 = vunpack.c.h.b16 %v39
  %v92 = vpack.c.b16 %v62, %v60
  %v93 = vpack.c.b16 %v63, %v61
  %v94 = vpack.c.b16 %v66, %v64
  %v95 = vpack.c.b16 %v67, %v65
  %v96 = vpack.c.b16 %v70, %v68
  %v97 = vpack.c.b16 %v71, %v69
  %v98 = vpack.c.b16 %v74, %v72
  %v99 = vpack.c.b16 %v75, %v73
  %v100 = vpack.c.b16 %v78, %v76
  %v101 = vpack.c.b16 %v79, %v77
  %v102 = vpack.c.b16 %v82, %v80
  %v103 = vpack.c.b16 %v83, %v81
  %v104 = vpack.c.b16 %v86, %v84
  %v105 = vpack.c.b16 %v87, %v85
  %v106 = vpack.c.b16 %v90, %v88
  %v107 = vpack.c.b16 %v91, %v89
  %124 = vmatprep.subr.bf16.mxu0 %v93
  %125 = vmatpush1.bf16.msra.mxu0 %v92
  %126 = vmatprep.subr.bf16.mxu0 %v95
  %127 = vmatpush1.bf16.msra.mxu0 %v94
  %128 = vmatprep.subr.bf16.mxu0 %v97
  %129 = vmatpush1.bf16.msra.mxu0 %v96
  %130 = vmatprep.subr.bf16.mxu0 %v99
  %131 = vmatpush1.bf16.msra.mxu0 %v98
  %132 = vmatprep.subr.bf16.mxu0 %v101
  %133 = vmatpush1.bf16.msra.mxu0 %v100
  %134 = vmatprep.subr.bf16.mxu0 %v103
  %135 = vmatpush1.bf16.msra.mxu0 %v102
  %136 = vmatprep.subr.bf16.mxu0 %v105
  %137 = vmatpush1.bf16.msra.mxu0 %v104
  %138 = vmatprep.subr.bf16.mxu0 %v107
  %139 = vmatpush1.bf16.msra.mxu0 %v106
  %140 = vmatprep.subr.bf16.mxu0 0
  %141 = vmatpush1.bf16.msra.mxu0 0
  %142 = vmatprep.subr.bf16.mxu0 0
  %143 = vmatpush1.bf16.msra.mxu0 0
  %144 = vmatprep.subr.bf16.mxu0 0
  %145 = vmatpush1.bf16.msra.mxu0 0
  %146 = vmatprep.subr.bf16.mxu0 0
  %147 = vmatpush1.bf16.msra.mxu0 0
  %148 = vmatprep.subr.bf16.mxu0 0
  %149 = vmatpush1.bf16.msra.mxu0 0
  %150 = vmatprep.subr.bf16.mxu0 0
  %151 = vmatpush1.bf16.msra.mxu0 0
  %152 = vmatprep.subr.bf16.mxu0 0
  %153 = vmatpush1.bf16.msra.mxu0 0
  %154 = vmatprep.subr.bf16.mxu0 0
  %155 = vmatpush1.bf16.msra.mxu0 0
  %156 = vmatprep.mubr.bf16.mxu0 0
  %157 = vmatmul.mubr.bf16.gmra.mrb[0].mxu0 %v43
  %v158 = vpop.f32.mrb[0].mxu0
  %v159 = vadd.f32 0.0, %v158
  %v160 = vpop.f32.mrb[0].mxu0
  %v161 = vadd.f32 0.0, %v160
  %v162 = vpop.f32.mrb[0].mxu0
  %v163 = vpop.f32.mrb[0].mxu0
  %164 = vdwg.mxu0
  %v165 = vadd.f32 %v41, %v159
  %v166 = vadd.f32 %v42, %v161
  %167 = vmax.xlane.f32.xlu0 %v166
  %v168 = vpop.xlane.xlu0 %167
  %v169 = vsub.f32 %v166, %v168
  %v170 = vmul.f32 %v169, 1.442695
  %v171 = vpow.pop %v170
  %172 = vadd.xlane.f32.xlu0 %v171
  %v173 = vpop.xlane.xlu0 %172
  %v174 = vlog2.pop %v173
  %v175 = vmul.f32 %v174, 0.6931472
  %v176 = vsub.f32 %v169, %v175
  %177 = vst [vmem:[%s3] sm:$0xff] %v176
  %p178 = scmp.lt.s32.totalorder %s23, 8
  %s179 = scalar_select %p178, 1, 0
  %v180 = vstv %s179
  %vm181 = vcmp.eq.s32.totalorder %v180, 1
  %v182 = vsel %vm181, %v165, %v40
  %s183 = scalar_lea.vmem %s0, 16
  %v184 = vld [vmem:[%s183] sm:$0xff]
  %v185 = vld [vmem:[%s183 + $0x8] sm:$0xff]
  %v186 = vpack.c.bf16 %v182, %v182
  %187 = vmatprep.subr.bf16.mxu0 %v93
  %188 = vmatpush1.bf16.msra.mxu0 %v92
  %189 = vmatprep.subr.bf16.mxu0 %v95
  %190 = vmatpush1.bf16.msra.mxu0 %v94
  %191 = vmatprep.subr.bf16.mxu0 %v97
  %192 = vmatpush1.bf16.msra.mxu0 %v96
  %193 = vmatprep.subr.bf16.mxu0 %v99
  %194 = vmatpush1.bf16.msra.mxu0 %v98
  %195 = vmatprep.subr.bf16.mxu0 %v101
  %196 = vmatpush1.bf16.msra.mxu0 %v100
  %197 = vmatprep.subr.bf16.mxu0 %v103
  %198 = vmatpush1.bf16.msra.mxu0 %v102
  %199 = vmatprep.subr.bf16.mxu0 %v105
  %200 = vmatpush1.bf16.msra.mxu0 %v104
  %201 = vmatprep.subr.bf16.mxu0 %v107
  %202 = vmatpush1.bf16.msra.mxu0 %v106
  %203 = vmatprep.subr.bf16.mxu0 0
  %204 = vmatpush1.bf16.msra.mxu0 0
  %205 = vmatprep.subr.bf16.mxu0 0
  %206 = vmatpush1.bf16.msra.mxu0 0
  %207 = vmatprep.subr.bf16.mxu0 0
  %208 = vmatpush1.bf16.msra.mxu0 0
  %209 = vmatprep.subr.bf16.mxu0 0
  %210 = vmatpush1.bf16.msra.mxu0 0
  %211 = vmatprep.subr.bf16.mxu0 0
  %212 = vmatpush1.bf16.msra.mxu0 0
  %213 = vmatprep.subr.bf16.mxu0 0
  %214 = vmatpush1.bf16.msra.mxu0 0
  %215 = vmatprep.subr.bf16.mxu0 0
  %216 = vmatpush1.bf16.msra.mxu0 0
  %217 = vmatprep.subr.bf16.mxu0 0
  %218 = vmatpush1.bf16.msra.mxu0 0
  %219 = vmatprep.mubr.bf16.mxu0 0
  %220 = vmatmul.mubr.bf16.gmra.mrb[0].mxu0 %v186
  %v221 = vpop.f32.mrb[0].mxu0
  %v222 = vadd.f32 0.0, %v221
  %v223 = vpop.f32.mrb[0].mxu0
  %v224 = vadd.f32 0.0, %v223
  %v225 = vpop.f32.mrb[0].mxu0
  %v226 = vpop.f32.mrb[0].mxu0
  %227 = vdwg.mxu0
  %v228 = vadd.f32 %v184, %v222
  %v229 = vadd.f32 %v185, %v224
  %230 = vmax.xlane.f32.xlu0 %v229
  %v231 = vpop.xlane.xlu0 %230
  %v232 = vsub.f32 %v229, %v231
  %v233 = vmul.f32 %v232, 1.442695
  %v234 = vpow.pop %v233
  %235 = vadd.xlane.f32.xlu0 %v234
  %v236 = vpop.xlane.xlu0 %235
  %v237 = vlog2.pop %v236
  %v238 = vmul.f32 %v237, 0.6931472
  %v239 = vsub.f32 %v232, %v238
  %s240 = scalar_lea.vmem %s3, 8
  %241 = vst [vmem:[%s240] sm:$0xff] %v239
  %s242 = sadd.s32 %s23, 1
  %p243 = scmp.lt.s32.totalorder %s242, 8
  %s244 = scalar_select %p243, 1, 0
  %v245 = vstv %s244
  %vm246 = vcmp.eq.s32.totalorder %v245, 1
  %v247 = vsel %vm246, %v228, %v182
  %s248 = scalar_lea.vmem %s0, 32
  %v249 = vld [vmem:[%s248] sm:$0xff]
  %v250 = vld [vmem:[%s248 + $0x8] sm:$0xff]
  %v251 = vpack.c.bf16 %v247, %v247
  %252 = vmatprep.subr.bf16.mxu0 %v93
  %253 = vmatpush1.bf16.msra.mxu0 %v92
  %254 = vmatprep.subr.bf16.mxu0 %v95
  %255 = vmatpush1.bf16.msra.mxu0 %v94
  %256 = vmatprep.subr.bf16.mxu0 %v97
  %257 = vmatpush1.bf16.msra.mxu0 %v96
  %258 = vmatprep.subr.bf16.mxu0 %v99
  %259 = vmatpush1.bf16.msra.mxu0 %v98
  %260 = vmatprep.subr.bf16.mxu0 %v101
  %261 = vmatpush1.bf16.msra.mxu0 %v100
  %262 = vmatprep.subr.bf16.mxu0 %v103
  %263 = vmatpush1.bf16.msra.mxu0 %v102
  %264 = vmatprep.subr.bf16.mxu0 %v105
  %265 = vmatpush1.bf16.msra.mxu0 %v104
  %266 = vmatprep.subr.bf16.mxu0 %v107
  %267 = vmatpush1.bf16.msra.mxu0 %v106
  %268 = vmatprep.subr.bf16.mxu0 0
  %269 = vmatpush1.bf16.msra.mxu0 0
  %270 = vmatprep.subr.bf16.mxu0 0
  %271 = vmatpush1.bf16.msra.mxu0 0
  %272 = vmatprep.subr.bf16.mxu0 0
  %273 = vmatpush1.bf16.msra.mxu0 0
  %274 = vmatprep.subr.bf16.mxu0 0
  %275 = vmatpush1.bf16.msra.mxu0 0
  %276 = vmatprep.subr.bf16.mxu0 0
  %277 = vmatpush1.bf16.msra.mxu0 0
  %278 = vmatprep.subr.bf16.mxu0 0
  %279 = vmatpush1.bf16.msra.mxu0 0
  %280 = vmatprep.subr.bf16.mxu0 0
  %281 = vmatpush1.bf16.msra.mxu0 0
  %282 = vmatprep.subr.bf16.mxu0 0
  %283 = vmatpush1.bf16.msra.mxu0 0
  %284 = vmatprep.mubr.bf16.mxu0 0
  %285 = vmatmul.mubr.bf16.gmra.mrb[0].mxu0 %v251
  %v286 = vpop.f32.mrb[0].mxu0
  %v287 = vadd.f32 0.0, %v286
  %v288 = vpop.f32.mrb[0].mxu0
  %v289 = vadd.f32 0.0, %v288
  %v290 = vpop.f32.mrb[0].mxu0
  %v291 = vpop.f32.mrb[0].mxu0
  %292 = vdwg.mxu0
  %v293 = vadd.f32 %v249, %v287
  %v294 = vadd.f32 %v250, %v289
  %295 = vmax.xlane.f32.xlu0 %v294
  %v296 = vpop.xlane.xlu0 %295
  %v297 = vsub.f32 %v294, %v296
  %v298 = vmul.f32 %v297, 1.442695
  %v299 = vpow.pop %v298
  %300 = vadd.xlane.f32.xlu0 %v299
  %v301 = vpop.xlane.xlu0 %300
  %v302 = vlog2.pop %v301
  %v303 = vmul.f32 %v302, 0.6931472
  %v304 = vsub.f32 %v297, %v303
  %s305 = scalar_lea.vmem %s3, 16
  %306 = vst [vmem:[%s305] sm:$0xff] %v304
  %s307 = sadd.s32 %s23, 2
  %p308 = scmp.lt.s32.totalorder %s307, 8
  %s309 = scalar_select %p308, 1, 0
  %v310 = vstv %s309
  %vm311 = vcmp.eq.s32.totalorder %v310, 1
  %v312 = vsel %vm311, %v293, %v247
  %s313 = scalar_lea.vmem %s0, 48
  %v314 = vld [vmem:[%s313] sm:$0xff]
  %v315 = vld [vmem:[%s313 + $0x8] sm:$0xff]
  %v316 = vpack.c.bf16 %v312, %v312
  %317 = vmatprep.subr.bf16.mxu0 %v93
  %318 = vmatpush1.bf16.msra.mxu0 %v92
  %319 = vmatprep.subr.bf16.mxu0 %v95
  %320 = vmatpush1.bf16.msra.mxu0 %v94
  %321 = vmatprep.subr.bf16.mxu0 %v97
  %322 = vmatpush1.bf16.msra.mxu0 %v96
  %323 = vmatprep.subr.bf16.mxu0 %v99
  %324 = vmatpush1.bf16.msra.mxu0 %v98
  %325 = vmatprep.subr.bf16.mxu0 %v101
  %326 = vmatpush1.bf16.msra.mxu0 %v100
  %327 = vmatprep.subr.bf16.mxu0 %v103
  %328 = vmatpush1.bf16.msra.mxu0 %v102
  %329 = vmatprep.subr.bf16.mxu0 %v105
  %330 = vmatpush1.bf16.msra.mxu0 %v104
  %331 = vmatprep.subr.bf16.mxu0 %v107
  %332 = vmatpush1.bf16.msra.mxu0 %v106
  %333 = vmatprep.subr.bf16.mxu0 0
  %334 = vmatpush1.bf16.msra.mxu0 0
  %335 = vmatprep.subr.bf16.mxu0 0
  %336 = vmatpush1.bf16.msra.mxu0 0
  %337 = vmatprep.subr.bf16.mxu0 0
  %338 = vmatpush1.bf16.msra.mxu0 0
  %339 = vmatprep.subr.bf16.mxu0 0
  %340 = vmatpush1.bf16.msra.mxu0 0
  %341 = vmatprep.subr.bf16.mxu0 0
  %342 = vmatpush1.bf16.msra.mxu0 0
  %343 = vmatprep.subr.bf16.mxu0 0
  %344 = vmatpush1.bf16.msra.mxu0 0
  %345 = vmatprep.subr.bf16.mxu0 0
  %346 = vmatpush1.bf16.msra.mxu0 0
  %347 = vmatprep.subr.bf16.mxu0 0
  %348 = vmatpush1.bf16.msra.mxu0 0
  %349 = vmatprep.mubr.bf16.mxu0 0
  %350 = vmatmul.mubr.bf16.gmra.mrb[0].mxu0 %v316
  %v351 = vpop.f32.mrb[0].mxu0
  %v352 = vadd.f32 0.0, %v351
  %v353 = vpop.f32.mrb[0].mxu0
  %v354 = vadd.f32 0.0, %v353
  %v355 = vpop.f32.mrb[0].mxu0
  %v356 = vpop.f32.mrb[0].mxu0
  %357 = vdwg.mxu0
  %v358 = vadd.f32 %v314, %v352
  %v359 = vadd.f32 %v315, %v354
  %360 = vmax.xlane.f32.xlu0 %v359
  %v361 = vpop.xlane.xlu0 %360
  %v362 = vsub.f32 %v359, %v361
  %v363 = vmul.f32 %v362, 1.442695
  %v364 = vpow.pop %v363
  %365 = vadd.xlane.f32.xlu0 %v364
  %v366 = vpop.xlane.xlu0 %365
  %v367 = vlog2.pop %v366
  %v368 = vmul.f32 %v367, 0.6931472
  %v369 = vsub.f32 %v362, %v368
  %s370 = scalar_lea.vmem %s3, 24
  %371 = vst [vmem:[%s370] sm:$0xff] %v369
  %s372 = sadd.s32 %s23, 3
  %p373 = scmp.lt.s32.totalorder %s372, 8
  %s374 = scalar_select %p373, 1, 0
  %v375 = vstv %s374
  %vm376 = vcmp.eq.s32.totalorder %v375, 1
  %v377 = vsel %vm376, %v358, %v312
  %s378 = scalar_lea.vmem %s0, 64
  %v379 = vld [vmem:[%s378] sm:$0xff]
  %v380 = vld [vmem:[%s378 + $0x8] sm:$0xff]
  %v381 = vpack.c.bf16 %v377, %v377
  %382 = vmatprep.subr.bf16.mxu0 %v93
  %383 = vmatpush1.bf16.msra.mxu0 %v92
  %384 = vmatprep.subr.bf16.mxu0 %v95
  %385 = vmatpush1.bf16.msra.mxu0 %v94
  %386 = vmatprep.subr.bf16.mxu0 %v97
  %387 = vmatpush1.bf16.msra.mxu0 %v96
  %388 = vmatprep.subr.bf16.mxu0 %v99
  %389 = vmatpush1.bf16.msra.mxu0 %v98
  %390 = vmatprep.subr.bf16.mxu0 %v101
  %391 = vmatpush1.bf16.msra.mxu0 %v100
  %392 = vmatprep.subr.bf16.mxu0 %v103
  %393 = vmatpush1.bf16.msra.mxu0 %v102
  %394 = vmatprep.subr.bf16.mxu0 %v105
  %395 = vmatpush1.bf16.msra.mxu0 %v104
  %396 = vmatprep.subr.bf16.mxu0 %v107
  %397 = vmatpush1.bf16.msra.mxu0 %v106
  %398 = vmatprep.subr.bf16.mxu0 0
  %399 = vmatpush1.bf16.msra.mxu0 0
  %400 = vmatprep.subr.bf16.mxu0 0
  %401 = vmatpush1.bf16.msra.mxu0 0
  %402 = vmatprep.subr.bf16.mxu0 0
  %403 = vmatpush1.bf16.msra.mxu0 0
  %404 = vmatprep.subr.bf16.mxu0 0
  %405 = vmatpush1.bf16.msra.mxu0 0
  %406 = vmatprep.subr.bf16.mxu0 0
  %407 = vmatpush1.bf16.msra.mxu0 0
  %408 = vmatprep.subr.bf16.mxu0 0
  %409 = vmatpush1.bf16.msra.mxu0 0
  %410 = vmatprep.subr.bf16.mxu0 0
  %411 = vmatpush1.bf16.msra.mxu0 0
  %412 = vmatprep.subr.bf16.mxu0 0
  %413 = vmatpush1.bf16.msra.mxu0 0
  %414 = vmatprep.mubr.bf16.mxu0 0
  %415 = vmatmul.mubr.bf16.gmra.mrb[0].mxu0 %v381
  %v416 = vpop.f32.mrb[0].mxu0
  %v417 = vadd.f32 0.0, %v416
  %v418 = vpop.f32.mrb[0].mxu0
  %v419 = vadd.f32 0.0, %v418
  %v420 = vpop.f32.mrb[0].mxu0
  %v421 = vpop.f32.mrb[0].mxu0
  %422 = vdwg.mxu0
  %v423 = vadd.f32 %v379, %v417
  %v424 = vadd.f32 %v380, %v419
  %425 = vmax.xlane.f32.xlu0 %v424
  %v426 = vpop.xlane.xlu0 %425
  %v427 = vsub.f32 %v424, %v426
  %v428 = vmul.f32 %v427, 1.442695
  %v429 = vpow.pop %v428
  %430 = vadd.xlane.f32.xlu0 %v429
  %v431 = vpop.xlane.xlu0 %430
  %v432 = vlog2.pop %v431
  %v433 = vmul.f32 %v432, 0.6931472
  %v434 = vsub.f32 %v427, %v433
  %s435 = scalar_lea.vmem %s3, 32
  %436 = vst [vmem:[%s435] sm:$0xff] %v434
  %s437 = sadd.s32 %s23, 4
  %p438 = scmp.lt.s32.totalorder %s437, 8
  %s439 = scalar_select %p438, 1, 0
  %v440 = vstv %s439
  %vm441 = vcmp.eq.s32.totalorder %v440, 1
  %v442 = vsel %vm441, %v423, %v377
  %s443 = scalar_lea.vmem %s0, 80
  %v444 = vld [vmem:[%s443] sm:$0xff]
  %v445 = vld [vmem:[%s443 + $0x8] sm:$0xff]
  %v446 = vpack.c.bf16 %v442, %v442
  %447 = vmatprep.subr.bf16.mxu0 %v93
  %448 = vmatpush1.bf16.msra.mxu0 %v92
  %449 = vmatprep.subr.bf16.mxu0 %v95
  %450 = vmatpush1.bf16.msra.mxu0 %v94
  %451 = vmatprep.subr.bf16.mxu0 %v97
  %452 = vmatpush1.bf16.msra.mxu0 %v96
  %453 = vmatprep.subr.bf16.mxu0 %v99
  %454 = vmatpush1.bf16.msra.mxu0 %v98
  %455 = vmatprep.subr.bf16.mxu0 %v101
  %456 = vmatpush1.bf16.msra.mxu0 %v100
  %457 = vmatprep.subr.bf16.mxu0 %v103
  %458 = vmatpush1.bf16.msra.mxu0 %v102
  %459 = vmatprep.subr.bf16.mxu0 %v105
  %460 = vmatpush1.bf16.msra.mxu0 %v104
  %461 = vmatprep.subr.bf16.mxu0 %v107
  %462 = vmatpush1.bf16.msra.mxu0 %v106
  %463 = vmatprep.subr.bf16.mxu0 0
  %464 = vmatpush1.bf16.msra.mxu0 0
  %465 = vmatprep.subr.bf16.mxu0 0
  %466 = vmatpush1.bf16.msra.mxu0 0
  %467 = vmatprep.subr.bf16.mxu0 0
  %468 = vmatpush1.bf16.msra.mxu0 0
  %469 = vmatprep.subr.bf16.mxu0 0
  %470 = vmatpush1.bf16.msra.mxu0 0
  %471 = vmatprep.subr.bf16.mxu0 0
  %472 = vmatpush1.bf16.msra.mxu0 0
  %473 = vmatprep.subr.bf16.mxu0 0
  %474 = vmatpush1.bf16.msra.mxu0 0
  %475 = vmatprep.subr.bf16.mxu0 0
  %476 = vmatpush1.bf16.msra.mxu0 0
  %477 = vmatprep.subr.bf16.mxu0 0
  %478 = vmatpush1.bf16.msra.mxu0 0
  %479 = vmatprep.mubr.bf16.mxu0 0
  %480 = vmatmul.mubr.bf16.gmra.mrb[0].mxu0 %v446
  %v481 = vpop.f32.mrb[0].mxu0
  %v482 = vadd.f32 0.0, %v481
  %v483 = vpop.f32.mrb[0].mxu0
  %v484 = vadd.f32 0.0, %v483
  %v485 = vpop.f32.mrb[0].mxu0
  %v486 = vpop.f32.mrb[0].mxu0
  %487 = vdwg.mxu0
  %v488 = vadd.f32 %v444, %v482
  %v489 = vadd.f32 %v445, %v484
  %490 = vmax.xlane.f32.xlu0 %v489
  %v491 = vpop.xlane.xlu0 %490
  %v492 = vsub.f32 %v489, %v491
  %v493 = vmul.f32 %v492, 1.442695
  %v494 = vpow.pop %v493
  %495 = vadd.xlane.f32.xlu0 %v494
  %v496 = vpop.xlane.xlu0 %495
  %v497 = vlog2.pop %v496
  %v498 = vmul.f32 %v497, 0.6931472
  %v499 = vsub.f32 %v492, %v498
  %s500 = scalar_lea.vmem %s3, 40
  %501 = vst [vmem:[%s500] sm:$0xff] %v499
  %s502 = sadd.s32 %s23, 5
  %p503 = scmp.lt.s32.totalorder %s502, 8
  %s504 = scalar_select %p503, 1, 0
  %v505 = vstv %s504
  %vm506 = vcmp.eq.s32.totalorder %v505, 1
  %v507 = vsel %vm506, %v488, %v442
  %s508 = scalar_lea.vmem %s0, 96
  %v509 = vld [vmem:[%s508] sm:$0xff]
  %v510 = vld [vmem:[%s508 + $0x8] sm:$0xff]
  %v511 = vpack.c.bf16 %v507, %v507
  %512 = vmatprep.subr.bf16.mxu0 %v93
  %513 = vmatpush1.bf16.msra.mxu0 %v92
  %514 = vmatprep.subr.bf16.mxu0 %v95
  %515 = vmatpush1.bf16.msra.mxu0 %v94
  %516 = vmatprep.subr.bf16.mxu0 %v97
  %517 = vmatpush1.bf16.msra.mxu0 %v96
  %518 = vmatprep.subr.bf16.mxu0 %v99
  %519 = vmatpush1.bf16.msra.mxu0 %v98
  %520 = vmatprep.subr.bf16.mxu0 %v101
  %521 = vmatpush1.bf16.msra.mxu0 %v100
  %522 = vmatprep.subr.bf16.mxu0 %v103
  %523 = vmatpush1.bf16.msra.mxu0 %v102
  %524 = vmatprep.subr.bf16.mxu0 %v105
  %525 = vmatpush1.bf16.msra.mxu0 %v104
  %526 = vmatprep.subr.bf16.mxu0 %v107
  %527 = vmatpush1.bf16.msra.mxu0 %v106
  %528 = vmatprep.subr.bf16.mxu0 0
  %529 = vmatpush1.bf16.msra.mxu0 0
  %530 = vmatprep.subr.bf16.mxu0 0
  %531 = vmatpush1.bf16.msra.mxu0 0
  %532 = vmatprep.subr.bf16.mxu0 0
  %533 = vmatpush1.bf16.msra.mxu0 0
  %534 = vmatprep.subr.bf16.mxu0 0
  %535 = vmatpush1.bf16.msra.mxu0 0
  %536 = vmatprep.subr.bf16.mxu0 0
  %537 = vmatpush1.bf16.msra.mxu0 0
  %538 = vmatprep.subr.bf16.mxu0 0
  %539 = vmatpush1.bf16.msra.mxu0 0
  %540 = vmatprep.subr.bf16.mxu0 0
  %541 = vmatpush1.bf16.msra.mxu0 0
  %542 = vmatprep.subr.bf16.mxu0 0
  %543 = vmatpush1.bf16.msra.mxu0 0
  %544 = vmatprep.mubr.bf16.mxu0 0
  %545 = vmatmul.mubr.bf16.gmra.mrb[0].mxu0 %v511
  %v546 = vpop.f32.mrb[0].mxu0
  %v547 = vadd.f32 0.0, %v546
  %v548 = vpop.f32.mrb[0].mxu0
  %v549 = vadd.f32 0.0, %v548
  %v550 = vpop.f32.mrb[0].mxu0
  %v551 = vpop.f32.mrb[0].mxu0
  %552 = vdwg.mxu0
  %v553 = vadd.f32 %v509, %v547
  %v554 = vadd.f32 %v510, %v549
  %555 = vmax.xlane.f32.xlu0 %v554
  %v556 = vpop.xlane.xlu0 %555
  %v557 = vsub.f32 %v554, %v556
  %v558 = vmul.f32 %v557, 1.442695
  %v559 = vpow.pop %v558
  %560 = vadd.xlane.f32.xlu0 %v559
  %v561 = vpop.xlane.xlu0 %560
  %v562 = vlog2.pop %v561
  %v563 = vmul.f32 %v562, 0.6931472
  %v564 = vsub.f32 %v557, %v563
  %s565 = scalar_lea.vmem %s3, 48
  %566 = vst [vmem:[%s565] sm:$0xff] %v564
  %s567 = sadd.s32 %s23, 6
  %p568 = scmp.lt.s32.totalorder %s567, 8
  %s569 = scalar_select %p568, 1, 0
  %v570 = vstv %s569
  %vm571 = vcmp.eq.s32.totalorder %v570, 1
  %v572 = vsel %vm571, %v553, %v507
  %s573 = scalar_lea.vmem %s0, 112
  %v574 = vld [vmem:[%s573] sm:$0xff]
  %v575 = vld [vmem:[%s573 + $0x8] sm:$0xff]
  %v576 = vpack.c.bf16 %v572, %v572
  %577 = vmatprep.subr.bf16.mxu0 %v93
  %578 = vmatpush1.bf16.msra.mxu0 %v92
  %579 = vmatprep.subr.bf16.mxu0 %v95
  %580 = vmatpush1.bf16.msra.mxu0 %v94
  %581 = vmatprep.subr.bf16.mxu0 %v97
  %582 = vmatpush1.bf16.msra.mxu0 %v96
  %583 = vmatprep.subr.bf16.mxu0 %v99
  %584 = vmatpush1.bf16.msra.mxu0 %v98
  %585 = vmatprep.subr.bf16.mxu0 %v101
  %586 = vmatpush1.bf16.msra.mxu0 %v100
  %587 = vmatprep.subr.bf16.mxu0 %v103
  %588 = vmatpush1.bf16.msra.mxu0 %v102
  %589 = vmatprep.subr.bf16.mxu0 %v105
  %590 = vmatpush1.bf16.msra.mxu0 %v104
  %591 = vmatprep.subr.bf16.mxu0 %v107
  %592 = vmatpush1.bf16.msra.mxu0 %v106
  %593 = vmatprep.subr.bf16.mxu0 0
  %594 = vmatpush1.bf16.msra.mxu0 0
  %595 = vmatprep.subr.bf16.mxu0 0
  %596 = vmatpush1.bf16.msra.mxu0 0
  %597 = vmatprep.subr.bf16.mxu0 0
  %598 = vmatpush1.bf16.msra.mxu0 0
  %599 = vmatprep.subr.bf16.mxu0 0
  %600 = vmatpush1.bf16.msra.mxu0 0
  %601 = vmatprep.subr.bf16.mxu0 0
  %602 = vmatpush1.bf16.msra.mxu0 0
  %603 = vmatprep.subr.bf16.mxu0 0
  %604 = vmatpush1.bf16.msra.mxu0 0
  %605 = vmatprep.subr.bf16.mxu0 0
  %606 = vmatpush1.bf16.msra.mxu0 0
  %607 = vmatprep.subr.bf16.mxu0 0
  %608 = vmatpush1.bf16.msra.mxu0 0
  %609 = vmatprep.mubr.bf16.mxu0 0
  %610 = vmatmul.mubr.bf16.gmra.mrb[0].mxu0 %v576
  %v611 = vpop.f32.mrb[0].mxu0
  %v612 = vadd.f32 0.0, %v611
  %v613 = vpop.f32.mrb[0].mxu0
  %v614 = vadd.f32 0.0, %v613
  %v615 = vpop.f32.mrb[0].mxu0
  %v616 = vpop.f32.mrb[0].mxu0
  %617 = vdwg.mxu0
  %v618 = vadd.f32 %v574, %v612
  %v619 = vadd.f32 %v575, %v614
  %620 = vmax.xlane.f32.xlu0 %v619
  %v621 = vpop.xlane.xlu0 %620
  %v622 = vsub.f32 %v619, %v621
  %v623 = vmul.f32 %v622, 1.442695
  %v624 = vpow.pop %v623
  %625 = vadd.xlane.f32.xlu0 %v624
  %v626 = vpop.xlane.xlu0 %625
  %v627 = vlog2.pop %v626
  %v628 = vmul.f32 %v627, 0.6931472
  %v629 = vsub.f32 %v622, %v628
  %s630 = scalar_lea.vmem %s3, 56
  %631 = vst [vmem:[%s630] sm:$0xff] %v629
  %s632 = sadd.s32 %s23, 7
  %p633 = scmp.lt.s32.totalorder %s632, 8
  %s634 = scalar_select %p633, 1, 0
  %v635 = vstv %s634
  %vm636 = vcmp.eq.s32.totalorder %v635, 1
  %v637 = vsel %vm636, %v618, %v572
  %638 = vst [vmem:[#allocation2] sm:$0xff] %v637
  %639 = vst [vmem:[%s4] sm:$0xff] %v637
  // Predicated region
  $region18: #{rnn_forward_sequence.1} parent=0 // pred_check
    _
  $region19: #{rnn_forward_sequence.1} parent=0 // pred_check_branch
    %641 = sbr.rel (0) target = $region21
  $region20: #{rnn_forward_sequence.1} parent=0 // pred_region
    _
  $region21: #{rnn_forward_sequence.1} parent=0 // pred_fallthru
    _
  // Predicated region
  $region22: #{rnn_forward_sequence.1} parent=0 // pred_check
    _
  $region23: #{rnn_forward_sequence.1} parent=0 // pred_check_branch
    %643 = sbr.rel (0) target = $region25
  $region24: #{rnn_forward_sequence.1} parent=0 // pred_region
    _
  $region25: #{rnn_forward_sequence.1} parent=0 // pred_fallthru
    _
  // Predicated region
  $region26: #{rnn_forward_sequence.1} parent=0 // pred_check
    _
  $region27: #{rnn_forward_sequence.1} parent=0 // pred_check_branch
    %645 = sbr.rel (0) target = $region29
  $region28: #{rnn_forward_sequence.1} parent=0 // pred_region
    _
  $region29: #{rnn_forward_sequence.1} parent=0 // pred_fallthru
    _
  // Predicated region
  $region30: #{rnn_forward_sequence.1} parent=0 // pred_check
    _
  $region31: #{rnn_forward_sequence.1} parent=0 // pred_check_branch
    %647 = sbr.rel (0) target = $region33
  $region32: #{rnn_forward_sequence.1} parent=0 // pred_region
    _
  $region33: #{rnn_forward_sequence.1} parent=0 // pred_fallthru
    _

</llo_original>
